<compile_context>
chip_gen: v5e
topology: v5e:2x2
jax: 0.10.0
libtpu: 0.0.40
codegen_flags: <defaults>
</compile_context>

<pallas_src>
import jax
import jax.numpy as jnp
from jax.experimental import pallas as pl
from jax.experimental.pallas import tpu as pltpu


def _cbam_kernel(x_ref, w1t_ref, b1_ref, w2t_ref, b2_ref, m_ref, bsa_ref,
                 o_ref):
    _, C, HW = x_ref.shape
    x = x_ref[...].astype(jnp.float32)                        # (B, C, HW)

    # ---- channel attention: GAP -> 1x1 conv -> ReLU -> 1x1 conv -> sigmoid
    avg_c = jnp.sum(x, axis=2) * (1.0 / HW)                   # (B, C)  lane reduce
    hidden = jnp.maximum(
        jnp.dot(avg_c, w1t_ref[...],
                preferred_element_type=jnp.float32) + b1_ref[...], 0.0)  # (B, Cr)
    ca = jax.nn.sigmoid(
        jnp.dot(hidden, w2t_ref[...],
                preferred_element_type=jnp.float32) + b2_ref[...])       # (B, C)
    x_ca = x * ca[:, :, None]                                 # (B, C, HW)

    # ---- spatial attention: [max_c | mean_c] -> fused 7x7 conv as ONE
    #      (B, 2*HW) x (2*HW, HW) Toeplitz matmul on the MXU.
    mx = jnp.max(x_ca, axis=1)                                # (B, HW) sublane reduce
    av = jnp.sum(x_ca, axis=1) * (1.0 / C)                    # (B, HW)
    pooled = jnp.concatenate([mx, av], axis=1)                # (B, 2*HW)
    sa = jax.nn.sigmoid(
        jnp.dot(pooled, m_ref[...],
                preferred_element_type=jnp.float32) + bsa_ref[0])        # (B, HW)

    o_ref[...] = (x_ca * sa[:, None, :]).astype(o_ref.dtype)


def _build_spatial_conv_matrix(w_sa, H, W):
    """Toeplitz form of Conv2d(2, 1, 7, padding=3) as one (2*H*W, H*W) matrix."""
    w = w_sa.reshape(2, 7, 7).astype(jnp.float32)
    hi = jnp.arange(H)
    wi = jnp.arange(W)
    dh = hi[:, None] - hi[None, :] + 3                        # (H_in, H_out)
    dw = wi[:, None] - wi[None, :] + 3                        # (W_in, W_out)
    vh = (dh >= 0) & (dh < 7)
    vw = (dw >= 0) & (dw < 7)
    dh_c = jnp.clip(dh, 0, 6)
    dw_c = jnp.clip(dw, 0, 6)
    # m[c, hi, wi, ho, wo] = w[c, hi-ho+3, wi-wo+3] (0 outside the 7x7 window)
    m = w[:, dh_c[:, None, :, None], dw_c[None, :, None, :]]  # (2, H, W, H, W)
    mask = (vh[:, None, :, None] & vw[None, :, None, :])[None]
    m = m * mask.astype(m.dtype)
    return m.reshape(2 * H * W, H * W)


def cbam_pallas(x, w1, b1, w2, b2, w_sa, b_sa, *, b_tile=None, conv_m=None):
    N, C, H, W = x.shape
    HW = H * W
    Cr = w1.shape[0]

    if b_tile is None:
        kind = jax.devices()[0].device_kind.lower()
        # v5e has a 16 MiB default scoped VMEM and a 4x128x128 MXU; keep tiles
        # smaller there. v6e/v7x amortize the ~0.35 us/step overhead better
        # with bigger batch tiles.
        b_tile = 64 if "v5 lite" in kind or "v5e" in kind else 128
    b_tile = max(1, min(b_tile, N))
    grid_n = pl.cdiv(N, b_tile)          # no pad; ragged last block is masked

    x_flat = x.reshape(N, C, HW)

    if conv_m is None:
        # For inference with static w_sa, precompute this once at model load
        # and pass it in to avoid re-materializing 2*HW^2 floats per call.
        conv_m = _build_spatial_conv_matrix(w_sa, H, W)       # (2*HW, HW)
    w1_t = jnp.transpose(w1).astype(jnp.float32)              # (C, Cr)
    w2_t = jnp.transpose(w2).astype(jnp.float32)              # (Cr, C)
    b1_r = b1.reshape(1, Cr).astype(jnp.float32)
    b2_r = b2.reshape(1, C).astype(jnp.float32)
    b_sa_f = b_sa.reshape(1).astype(jnp.float32)

    # Grid-invariant operands: single-buffer them (index_map is constant, so
    # double-buffering only wastes VMEM — matters most for the Toeplitz matrix).
    const_buf = pl.Buffered(1)

    # Explicit VMEM budget: 2x double-buffered (in + out) blocks, ~4 block-sized
    # f32 temporaries inside the kernel, plus the single-buffered constants.
    itemsize = jnp.dtype(x.dtype).itemsize
    blk_io = b_tile * C * HW * itemsize
    blk_f32 = b_tile * C * HW * 4
    const_bytes = (2 * HW * HW + 2 * C * Cr + Cr + C + 1) * 4
    vmem_est = 4 * blk_io + 4 * blk_f32 + 2 * const_bytes + (4 << 20)
    vmem_limit = int(min(max(vmem_est, 32 << 20), 64 << 20))  # <= v7x physical

    grid_spec = pltpu.PrefetchScalarGridSpec(
        num_scalar_prefetch=0,
        grid=(grid_n,),
        in_specs=[
            pl.BlockSpec((b_tile, C, HW), lambda n: (n, 0, 0)),
            pl.BlockSpec((C, Cr), lambda n: (0, 0), pipeline_mode=const_buf),
            pl.BlockSpec((1, Cr), lambda n: (0, 0), pipeline_mode=const_buf),
            pl.BlockSpec((Cr, C), lambda n: (0, 0), pipeline_mode=const_buf),
            pl.BlockSpec((1, C), lambda n: (0, 0), pipeline_mode=const_buf),
            pl.BlockSpec((2 * HW, HW), lambda n: (0, 0),
                         pipeline_mode=const_buf),
            pl.BlockSpec(memory_space=pltpu.MemorySpace.SMEM),
        ],
        out_specs=pl.BlockSpec((b_tile, C, HW), lambda n: (n, 0, 0)),
    )
    out = pl.pallas_call(
        _cbam_kernel,
        out_shape=jax.ShapeDtypeStruct((N, C, HW), x.dtype),
        grid_spec=grid_spec,
        compiler_params=pltpu.CompilerParams(
            dimension_semantics=("parallel",),   # batch axis -> both TCs on v7x
            vmem_limit_bytes=vmem_limit),
    )(x_flat, w1_t, b1_r, w2_t, b2_r, conv_m, b_sa_f)

    return out.reshape(N, C, H, W)


def cbam_ref(x, w1, b1, w2, b2, w_sa, b_sa):
    # Pure-JAX reference mirroring the PyTorch module semantics, computed at
    # HIGHEST precision so it serves as an (exact f32) ground truth.
    hp = jax.lax.Precision.HIGHEST
    avg = jnp.mean(x, axis=(2, 3))                            # (N, C)
    hidden = jax.nn.relu(jnp.dot(avg, w1.T, precision=hp) + b1)      # (N, Cr)
    ca = jax.nn.sigmoid(jnp.dot(hidden, w2.T, precision=hp) + b2)    # (N, C)
    x_ca = x * ca[:, :, None, None]
    mx = jnp.max(x_ca, axis=1, keepdims=True)
    av = jnp.mean(x_ca, axis=1, keepdims=True)
    inp = jnp.concatenate([mx, av], axis=1)                   # (N, 2, H, W)
    sa = jax.lax.conv_general_dilated(
        inp, w_sa, window_strides=(1, 1), padding=((3, 3), (3, 3)),
        dimension_numbers=("NCHW", "OIHW", "NCHW"), precision=hp) + b_sa[0]
    return x_ca * jax.nn.sigmoid(sa)


if __name__ == "__main__":
    N, C, H, W = 4, 32, 16, 16          # channels must be >= reduction_ratio (16)
    Cr = C // 16

    key = jax.random.PRNGKey(0)
    ks = jax.random.split(key, 7)
    x = jax.random.normal(ks[0], (N, C, H, W), jnp.float32)
    # Deterministic synthetic parameters (shapes from the module __init__):
    w1 = jax.random.normal(ks[1], (Cr, C), jnp.float32) * 0.2    # Conv2d(C, C//16, 1).weight
    b1 = jax.random.normal(ks[2], (1, Cr), jnp.float32) * 0.1    # its bias
    w2 = jax.random.normal(ks[3], (C, Cr), jnp.float32) * 0.2    # Conv2d(C//16, C, 1).weight
    b2 = jax.random.normal(ks[4], (1, C), jnp.float32) * 0.1     # its bias
    w_sa = jax.random.normal(ks[5], (1, 2, 7, 7), jnp.float32) * 0.1  # Conv2d(2, 1, 7).weight
    b_sa = jax.random.normal(ks[6], (1,), jnp.float32) * 0.1          # its bias

    out = cbam_pallas(x, w1, b1, w2, b2, w_sa, b_sa)
    out = jax.block_until_ready(out)

    ref = cbam_ref(x, w1, b1, w2, b2, w_sa, b_sa)
    assert out.shape == x.shape and out.dtype == x.dtype
    # DEFAULT MXU precision (single bf16 pass, f32 accumulate) over the 98-term
    # 7x7-conv contraction gives a few e-3 absolute error vs the exact-f32
    # reference; 3e-3 tolerance leaves comfortable margin.
    err = float(jnp.max(jnp.abs(out - ref)))
    assert jnp.allclose(out, ref, atol=3e-3, rtol=3e-3), err
    print("KERNEL_OK")
</pallas_src>

<mosaic_0001>
module attributes {stable_mosaic.version = 11 : i64} {
  func.func @_cbam_kernel(%arg0: i32, %arg1: memref<4x32x256xf32, #tpu.memory_space<vmem>>, %arg2: memref<32x2xf32, #tpu.memory_space<vmem>>, %arg3: memref<1x2xf32, #tpu.memory_space<vmem>>, %arg4: memref<2x32xf32, #tpu.memory_space<vmem>>, %arg5: memref<1x32xf32, #tpu.memory_space<vmem>>, %arg6: memref<512x256xf32, #tpu.memory_space<vmem>>, %arg7: memref<1xf32, #tpu.memory_space<smem>>, %arg8: memref<4x32x256xf32, #tpu.memory_space<vmem>>) attributes {dimension_semantics = [#tpu.dimension_semantics<parallel>], iteration_bounds = array<i64: 1>, scalar_prefetch = 0 : i64, scratch_operands = 0 : i64, tpu.core_type = #tpu.core_type<tc>, window_params = [{transform_indices = @transform_0, window_bounds = array<i64: 4, 32, 256>}, {pipeline_mode = #tpu.pipeline_mode<synchronous>, transform_indices = @transform_1, window_bounds = array<i64: 32, 2>}, {pipeline_mode = #tpu.pipeline_mode<synchronous>, transform_indices = @transform_2, window_bounds = array<i64: 1, 2>}, {pipeline_mode = #tpu.pipeline_mode<synchronous>, transform_indices = @transform_3, window_bounds = array<i64: 2, 32>}, {pipeline_mode = #tpu.pipeline_mode<synchronous>, transform_indices = @transform_4, window_bounds = array<i64: 1, 32>}, {pipeline_mode = #tpu.pipeline_mode<synchronous>, transform_indices = @transform_5, window_bounds = array<i64: 512, 256>}, {transform_indices = @transform_6, window_bounds = array<i64: 1>}, {transform_indices = @transform_7, window_bounds = array<i64: 4, 32, 256>}]} {
    %c0 = arith.constant 0 : index
    %c0_0 = arith.constant 0 : index
    %c0_1 = arith.constant 0 : index
    %0 = vector.load %arg1[%c0, %c0_0, %c0_1] : memref<4x32x256xf32, #tpu.memory_space<vmem>>, vector<4x32x256xf32>
    %cst = arith.constant dense<0.000000e+00> : vector<4x32xf32>
    %1 = vector.multi_reduction <add>, %0, %cst [2] : vector<4x32x256xf32> to vector<4x32xf32>
    %cst_2 = arith.constant 3.906250e-03 : f32
    %2 = vector.broadcast %cst_2 : f32 to vector<4x32xf32>
    %3 = arith.mulf %1, %2 : vector<4x32xf32>
    %c0_3 = arith.constant 0 : index
    %c0_4 = arith.constant 0 : index
    %4 = vector.load %arg2[%c0_3, %c0_4] : memref<32x2xf32, #tpu.memory_space<vmem>>, vector<32x2xf32>
    %cst_5 = arith.constant dense<0.000000e+00> : vector<4x2xf32>
    %5 = tpu.matmul %3, %4, %cst_5 {dimension_numbers = #tpu.dot_dimension_numbers<[1], [0], [0], [1], [0, 0, 1, 1], [], []>} : vector<4x32xf32>, vector<32x2xf32>, vector<4x2xf32> -> vector<4x2xf32>
    %c0_6 = arith.constant 0 : index
    %c0_7 = arith.constant 0 : index
    %6 = vector.load %arg3[%c0_6, %c0_7] : memref<1x2xf32, #tpu.memory_space<vmem>>, vector<1x2xf32>
    %7 = vector.broadcast %6 : vector<1x2xf32> to vector<4x2xf32>
    %8 = arith.addf %5, %7 : vector<4x2xf32>
    %cst_8 = arith.constant 0.000000e+00 : f32
    %9 = vector.broadcast %cst_8 : f32 to vector<4x2xf32>
    %10 = arith.maximumf %8, %9 : vector<4x2xf32>
    %c0_9 = arith.constant 0 : index
    %c0_10 = arith.constant 0 : index
    %11 = vector.load %arg4[%c0_9, %c0_10] : memref<2x32xf32, #tpu.memory_space<vmem>>, vector<2x32xf32>
    %cst_11 = arith.constant dense<0.000000e+00> : vector<4x32xf32>
    %12 = tpu.matmul %10, %11, %cst_11 {dimension_numbers = #tpu.dot_dimension_numbers<[1], [0], [0], [1], [0, 0, 1, 1], [], []>} : vector<4x2xf32>, vector<2x32xf32>, vector<4x32xf32> -> vector<4x32xf32>
    %c0_12 = arith.constant 0 : index
    %c0_13 = arith.constant 0 : index
    %13 = vector.load %arg5[%c0_12, %c0_13] : memref<1x32xf32, #tpu.memory_space<vmem>>, vector<1x32xf32>
    %14 = vector.broadcast %13 : vector<1x32xf32> to vector<4x32xf32>
    %15 = arith.addf %12, %14 : vector<4x32xf32>
    %16 = arith.negf %15 : vector<4x32xf32>
    %17 = math.exp %16 : vector<4x32xf32>
    %cst_14 = arith.constant 1.000000e+00 : f32
    %18 = vector.broadcast %cst_14 : f32 to vector<4x32xf32>
    %19 = arith.addf %18, %17 : vector<4x32xf32>
    %20 = arith.divf %18, %19 : vector<4x32xf32>
    %21 = vector.shape_cast %20 : vector<4x32xf32> to vector<4x32x1xf32>
    %22 = vector.broadcast %21 : vector<4x32x1xf32> to vector<4x32x256xf32>
    %23 = arith.mulf %0, %22 : vector<4x32x256xf32>
    %cst_15 = arith.constant dense<0xFF800000> : vector<4x256xf32>
    %24 = vector.multi_reduction <maximumf>, %23, %cst_15 [1] : vector<4x32x256xf32> to vector<4x256xf32>
    %cst_16 = arith.constant dense<0.000000e+00> : vector<4x256xf32>
    %25 = vector.multi_reduction <add>, %23, %cst_16 [1] : vector<4x32x256xf32> to vector<4x256xf32>
    %cst_17 = arith.constant 3.125000e-02 : f32
    %26 = vector.broadcast %cst_17 : f32 to vector<4x256xf32>
    %27 = arith.mulf %25, %26 : vector<4x256xf32>
    %28 = tpu.concatenate %24, %27 in 1 : vector<4x256xf32>, vector<4x256xf32> -> vector<4x512xf32>
    %c0_18 = arith.constant 0 : index
    %c0_19 = arith.constant 0 : index
    %29 = vector.load %arg6[%c0_18, %c0_19] : memref<512x256xf32, #tpu.memory_space<vmem>>, vector<512x256xf32>
    %cst_20 = arith.constant dense<0.000000e+00> : vector<4x256xf32>
    %30 = tpu.matmul %28, %29, %cst_20 {dimension_numbers = #tpu.dot_dimension_numbers<[1], [0], [0], [1], [0, 0, 1, 1], [], []>} : vector<4x512xf32>, vector<512x256xf32>, vector<4x256xf32> -> vector<4x256xf32>
    %c0_21 = arith.constant 0 : index
    %31 = memref.load %arg7[%c0_21] : memref<1xf32, #tpu.memory_space<smem>>
    %32 = vector.broadcast %31 : f32 to vector<4x256xf32>
    %33 = arith.addf %30, %32 : vector<4x256xf32>
    %34 = arith.negf %33 : vector<4x256xf32>
    %35 = math.exp %34 : vector<4x256xf32>
    %cst_22 = arith.constant 1.000000e+00 : f32
    %36 = vector.broadcast %cst_22 : f32 to vector<4x256xf32>
    %37 = arith.addf %36, %35 : vector<4x256xf32>
    %38 = arith.divf %36, %37 : vector<4x256xf32>
    %39 = vector.shape_cast %38 : vector<4x256xf32> to vector<4x1x256xf32>
    %40 = vector.broadcast %39 : vector<4x1x256xf32> to vector<4x32x256xf32>
    %41 = arith.mulf %23, %40 : vector<4x32x256xf32>
    %c0_23 = arith.constant 0 : index
    %c0_24 = arith.constant 0 : index
    %c0_25 = arith.constant 0 : index
    %42 = vector.load %arg8[%c0_23, %c0_24, %c0_25] : memref<4x32x256xf32, #tpu.memory_space<vmem>>, vector<4x32x256xf32>
    tpu.vector_store %arg8[%c0_23, %c0_24, %c0_25], %41 {strides = array<i32>} : memref<4x32x256xf32, #tpu.memory_space<vmem>>, vector<4x32x256xf32>,
    return
  }
  func.func @transform_0(%arg0: i32) -> (i32, i32, i32) {
    %c0_i32 = arith.constant 0 : i32
    %c0_i32_0 = arith.constant 0 : i32
    %c0_i32_1 = arith.constant 0 : i32
    return %arg0, %c0_i32, %c0_i32_0 : i32, i32, i32
  }
  func.func @transform_1(%arg0: i32) -> (i32, i32) {
    %c0_i32 = arith.constant 0 : i32
    %c0_i32_0 = arith.constant 0 : i32
    %c0_i32_1 = arith.constant 0 : i32
    return %c0_i32, %c0_i32_0 : i32, i32
  }
  func.func @transform_2(%arg0: i32) -> (i32, i32) {
    %c0_i32 = arith.constant 0 : i32
    %c0_i32_0 = arith.constant 0 : i32
    %c0_i32_1 = arith.constant 0 : i32
    return %c0_i32, %c0_i32_0 : i32, i32
  }
  func.func @transform_3(%arg0: i32) -> (i32, i32) {
    %c0_i32 = arith.constant 0 : i32
    %c0_i32_0 = arith.constant 0 : i32
    %c0_i32_1 = arith.constant 0 : i32
    return %c0_i32, %c0_i32_0 : i32, i32
  }
  func.func @transform_4(%arg0: i32) -> (i32, i32) {
    %c0_i32 = arith.constant 0 : i32
    %c0_i32_0 = arith.constant 0 : i32
    %c0_i32_1 = arith.constant 0 : i32
    return %c0_i32, %c0_i32_0 : i32, i32
  }
  func.func @transform_5(%arg0: i32) -> (i32, i32) {
    %c0_i32 = arith.constant 0 : i32
    %c0_i32_0 = arith.constant 0 : i32
    %c0_i32_1 = arith.constant 0 : i32
    return %c0_i32, %c0_i32_0 : i32, i32
  }
  func.func @transform_6(%arg0: i32) -> i32 {
    %c0_i32 = arith.constant 0 : i32
    %c0_i32_0 = arith.constant 0 : i32
    return %c0_i32 : i32
  }
  func.func @transform_7(%arg0: i32) -> (i32, i32, i32) {
    %c0_i32 = arith.constant 0 : i32
    %c0_i32_0 = arith.constant 0 : i32
    %c0_i32_1 = arith.constant 0 : i32
    return %arg0, %c0_i32, %c0_i32_0 : i32, i32, i32
  }
}

</mosaic_0001>

<llo_original>
// kernel: tpu_custom_call.1
$region0: #{tpu_custom_call.1}
  #allocation0 [shape = 'u32[]', space=smem, size = 0x4, offset = 0x4, fixed_abs, tag = 'smem constant byte address 0x4 - core index']
  #allocation1 [shape = 'u32[72,128]{1,0:T(1,128)}', space=vmem, size = 0x9000, scoped, tag = 'internal scratch']
  #allocation2 [shape = 'f32[1]{0:T(128)S(6)}', space=smem, size = 0x200, scoped, tag = 'scoped memory for tpu_custom_call.1']
  %s0 = inlined_call_operand.hbm [shape: f32[4,32,256], index: 0, kind: input, shape index: {}]
  %s1 = inlined_call_operand.vmem [shape: f32[32,2], index: 1, kind: input, shape index: {}]
  %s2 = inlined_call_operand.vmem [shape: f32[1,2], index: 2, kind: input, shape index: {}]
  %s3 = inlined_call_operand.vmem [shape: f32[2,32], index: 3, kind: input, shape index: {}]
  %s4 = inlined_call_operand.vmem [shape: f32[1,32], index: 4, kind: input, shape index: {}]
  %s5 = inlined_call_operand.hbm [shape: f32[512,256], index: 5, kind: input, shape index: {}]
  %s6 = inlined_call_operand.<no memory space> [shape: f32[1], index: 6, kind: input, shape index: {}]
  %s7 = inlined_call_operand.hbm [shape: f32[4,32,256], index: 7, kind: output, shape index: {}]
  %s8 = sld [smem:[#allocation0]]
  $region46: #{tpu_custom_call.1} parent=0
    _
  %s10 = ssub.s32 1, %s8
  %s11 = scalar_select 0, %s10, %s8
  %12 = sst [smem:[#allocation2]] %s6
  $region1: #{tpu_custom_call.1} parent=0
    #allocation3 [shape = 'u8[131072]{0}', space=vmem, size = 0x20000, scoped, tag = 'input window, operand 0, single buffered']
    #allocation4 [shape = 's32[1]{0}', space=sflag, size = 0x4, scoped, tag = 'scoped memory for tpu_custom_call.1']
    #allocation5 [shape = 's32[1]{0}', space=sflag, size = 0x4, scoped, tag = 'scoped memory for tpu_custom_call.1']
    #allocation6 [shape = 'u8[524288]{0}', space=vmem, size = 0x80000, scoped, tag = 'input window, operand 5, single buffered']
    #allocation7 [shape = 's32[1]{0}', space=sflag, size = 0x4, scoped, tag = 'scoped memory for tpu_custom_call.1']
    #allocation8 [shape = 'u8[131072]{0}', space=vmem, size = 0x20000, scoped, tag = 'output window, operand 0, single buffered']
    %13 = vsyncpa [#allocation4], 0
    %14 = vsyncpa [#allocation7], 0
    %15 = vsyncpa [#allocation5], 0
    // Predicated region
    $region2: #{tpu_custom_call.1} parent=1 // pred_check
      _
    $region3: #{tpu_custom_call.1} parent=1 // pred_check_branch
      %17 = sbr.rel (0) target = $region5
    $region4: #{tpu_custom_call.1} parent=1 // pred_region
      %19 = vsyncadd [#allocation4], 0
      %s20 = sshll.u32 %s0, 4
      %s21 = int_to_ptr.hbm [resolvable:$true] %s20
      %s22 = sshll.u32 [#allocation3], 4
      %s23 = int_to_ptr.vmem [resolvable:$true] %s22
      %28 = dma.hbm_to_vmem [thread:$0]  %s21, 4096, %s23, [#allocation4], 256, 256, 16
    $region5: #{tpu_custom_call.1} parent=1 // pred_fallthru
      _
    // Predicated region
    $region6: #{tpu_custom_call.1} parent=1 // pred_check
      _
    $region7: #{tpu_custom_call.1} parent=1 // pred_check_branch
      %30 = sbr.rel (0) target = $region9
    $region8: #{tpu_custom_call.1} parent=1 // pred_region
      _
    $region9: #{tpu_custom_call.1} parent=1 // pred_fallthru
      _
    // Predicated region
    $region10: #{tpu_custom_call.1} parent=1 // pred_check
      _
    $region11: #{tpu_custom_call.1} parent=1 // pred_check_branch
      %32 = sbr.rel (0) target = $region13
    $region12: #{tpu_custom_call.1} parent=1 // pred_region
      _
    $region13: #{tpu_custom_call.1} parent=1 // pred_fallthru
      _
    // Predicated region
    $region14: #{tpu_custom_call.1} parent=1 // pred_check
      _
    $region15: #{tpu_custom_call.1} parent=1 // pred_check_branch
      %34 = sbr.rel (0) target = $region17
    $region16: #{tpu_custom_call.1} parent=1 // pred_region
      _
    $region17: #{tpu_custom_call.1} parent=1 // pred_fallthru
      _
    // Predicated region
    $region18: #{tpu_custom_call.1} parent=1 // pred_check
      _
    $region19: #{tpu_custom_call.1} parent=1 // pred_check_branch
      %36 = sbr.rel (0) target = $region21
    $region20: #{tpu_custom_call.1} parent=1 // pred_region
      _
    $region21: #{tpu_custom_call.1} parent=1 // pred_fallthru
      _
    // Predicated region
    $region22: #{tpu_custom_call.1} parent=1 // pred_check
      _
    $region23: #{tpu_custom_call.1} parent=1 // pred_check_branch
      %38 = sbr.rel (0) target = $region25
    $region24: #{tpu_custom_call.1} parent=1 // pred_region
      %40 = vsyncadd [#allocation7], 0
      %s41 = sshll.u32 %s5, 4
      %s42 = int_to_ptr.hbm [resolvable:$true] %s41
      %s43 = sshll.u32 [#allocation6], 4
      %s44 = int_to_ptr.vmem [resolvable:$true] %s43
      %49 = dma.hbm_to_vmem [thread:$0]  %s42, 16384, %s44, [#allocation7], 256, 256, 16
    $region25: #{tpu_custom_call.1} parent=1 // pred_fallthru
      _
    // Predicated region
    $region26: #{tpu_custom_call.1} parent=1 // pred_check
      _
    $region27: #{tpu_custom_call.1} parent=1 // pred_check_branch
      %51 = sbr.rel (0) target = $region29
    $region28: #{tpu_custom_call.1} parent=1 // pred_region
      _
    $region29: #{tpu_custom_call.1} parent=1 // pred_fallthru
      _
    // Predicated region
    $region30: #{tpu_custom_call.1} parent=1 // pred_check
      _
    $region31: #{tpu_custom_call.1} parent=1 // pred_check_branch
      %53 = sbr.rel (0) target = $region33
    $region32: #{tpu_custom_call.1} parent=1 // pred_region
      %55 = dma.done [#allocation4], 4096
    $region33: #{tpu_custom_call.1} parent=1 // pred_fallthru
      _
    // Predicated region
    $region34: #{tpu_custom_call.1} parent=1 // pred_check
      _
    $region35: #{tpu_custom_call.1} parent=1 // pred_check_branch
      %57 = sbr.rel (0) target = $region37
    $region36: #{tpu_custom_call.1} parent=1 // pred_region
      %59 = dma.done [#allocation7], 16384
    $region37: #{tpu_custom_call.1} parent=1 // pred_fallthru
      _
    %v60 = vld [vmem:[#allocation3] sm:$0xff]
    %v61 = vld [vmem:[#allocation3 + $0x8] sm:$0xff]
    %v62 = vld [vmem:[#allocation3 + $0x10] sm:$0xff]
    %v63 = vld [vmem:[#allocation3 + $0x18] sm:$0xff]
    %v64 = vld [vmem:[#allocation3 + $0x20] sm:$0xff]
    %v65 = vld [vmem:[#allocation3 + $0x28] sm:$0xff]
    %v66 = vld [vmem:[#allocation3 + $0x30] sm:$0xff]
    %v67 = vld [vmem:[#allocation3 + $0x38] sm:$0xff]
    %v68 = vld [vmem:[#allocation3 + $0x40] sm:$0xff]
    %v69 = vld [vmem:[#allocation3 + $0x48] sm:$0xff]
    %v70 = vld [vmem:[#allocation3 + $0x50] sm:$0xff]
    %v71 = vld [vmem:[#allocation3 + $0x58] sm:$0xff]
    %v72 = vld [vmem:[#allocation3 + $0x60] sm:$0xff]
    %v73 = vld [vmem:[#allocation3 + $0x68] sm:$0xff]
    %v74 = vld [vmem:[#allocation3 + $0x70] sm:$0xff]
    %v75 = vld [vmem:[#allocation3 + $0x78] sm:$0xff]
    %v76 = vld [vmem:[#allocation3 + $0x80] sm:$0xff]
    %v77 = vld [vmem:[#allocation3 + $0x88] sm:$0xff]
    %v78 = vld [vmem:[#allocation3 + $0x90] sm:$0xff]
    %v79 = vld [vmem:[#allocation3 + $0x98] sm:$0xff]
    %v80 = vld [vmem:[#allocation3 + $0xa0] sm:$0xff]
    %v81 = vld [vmem:[#allocation3 + $0xa8] sm:$0xff]
    %v82 = vld [vmem:[#allocation3 + $0xb0] sm:$0xff]
    %v83 = vld [vmem:[#allocation3 + $0xb8] sm:$0xff]
    %v84 = vld [vmem:[#allocation3 + $0xc0] sm:$0xff]
    %v85 = vld [vmem:[#allocation3 + $0xc8] sm:$0xff]
    %v86 = vld [vmem:[#allocation3 + $0xd0] sm:$0xff]
    %v87 = vld [vmem:[#allocation3 + $0xd8] sm:$0xff]
    %v88 = vld [vmem:[#allocation3 + $0xe0] sm:$0xff]
    %v89 = vld [vmem:[#allocation3 + $0xe8] sm:$0xff]
    %v90 = vld [vmem:[#allocation3 + $0xf0] sm:$0xff]
    %v91 = vld [vmem:[#allocation3 + $0xf8] sm:$0xff]
    %v92 = vadd.f32 %v60, %v61
    %93 = vadd.xlane.f32.xlu0 %v92
    %v94 = vpop.xlane.xlu0 %93
    %v95 = vadd.f32 %v62, %v63
    %96 = vadd.xlane.f32.xlu0 %v95
    %v97 = vpop.xlane.xlu0 %96
    %v98 = vadd.f32 %v64, %v65
    %99 = vadd.xlane.f32.xlu0 %v98
    %v100 = vpop.xlane.xlu0 %99
    %v101 = vadd.f32 %v66, %v67
    %102 = vadd.xlane.f32.xlu0 %v101
    %v103 = vpop.xlane.xlu0 %102
    %v104 = vadd.f32 %v68, %v69
    %105 = vadd.xlane.f32.xlu0 %v104
    %v106 = vpop.xlane.xlu0 %105
    %v107 = vadd.f32 %v70, %v71
    %108 = vadd.xlane.f32.xlu0 %v107
    %v109 = vpop.xlane.xlu0 %108
    %v110 = vadd.f32 %v72, %v73
    %111 = vadd.xlane.f32.xlu0 %v110
    %v112 = vpop.xlane.xlu0 %111
    %v113 = vadd.f32 %v74, %v75
    %114 = vadd.xlane.f32.xlu0 %v113
    %v115 = vpop.xlane.xlu0 %114
    %v116 = vadd.f32 %v76, %v77
    %117 = vadd.xlane.f32.xlu0 %v116
    %v118 = vpop.xlane.xlu0 %117
    %v119 = vadd.f32 %v78, %v79
    %120 = vadd.xlane.f32.xlu0 %v119
    %v121 = vpop.xlane.xlu0 %120
    %v122 = vadd.f32 %v80, %v81
    %123 = vadd.xlane.f32.xlu0 %v122
    %v124 = vpop.xlane.xlu0 %123
    %v125 = vadd.f32 %v82, %v83
    %126 = vadd.xlane.f32.xlu0 %v125
    %v127 = vpop.xlane.xlu0 %126
    %v128 = vadd.f32 %v84, %v85
    %129 = vadd.xlane.f32.xlu0 %v128
    %v130 = vpop.xlane.xlu0 %129
    %v131 = vadd.f32 %v86, %v87
    %132 = vadd.xlane.f32.xlu0 %v131
    %v133 = vpop.xlane.xlu0 %132
    %v134 = vadd.f32 %v88, %v89
    %135 = vadd.xlane.f32.xlu0 %v134
    %v136 = vpop.xlane.xlu0 %135
    %v137 = vadd.f32 %v90, %v91
    %138 = vadd.xlane.f32.xlu0 %v137
    %v139 = vpop.xlane.xlu0 %138
    %v140 = vmul.f32 %v94, 0.00390625
    %v141 = vmul.f32 %v97, 0.00390625
    %v142 = vmul.f32 %v100, 0.00390625
    %v143 = vmul.f32 %v103, 0.00390625
    %v144 = vmul.f32 %v106, 0.00390625
    %v145 = vmul.f32 %v109, 0.00390625
    %v146 = vmul.f32 %v112, 0.00390625
    %v147 = vmul.f32 %v115, 0.00390625
    %v148 = vmul.f32 %v118, 0.00390625
    %v149 = vmul.f32 %v121, 0.00390625
    %v150 = vmul.f32 %v124, 0.00390625
    %v151 = vmul.f32 %v127, 0.00390625
    %v152 = vmul.f32 %v130, 0.00390625
    %v153 = vmul.f32 %v133, 0.00390625
    %v154 = vmul.f32 %v136, 0.00390625
    %v155 = vmul.f32 %v139, 0.00390625
    %v156 = vld [vmem:[%s1] sm:$0xff]
    %v157 = vld [vmem:[%s1 + $0x8] sm:$0xff]
    %v158 = vld [vmem:[%s1 + $0x10] sm:$0xff]
    %v159 = vld [vmem:[%s1 + $0x18] sm:$0xff]
    %v160 = vld [vmem:[%s2] sm:$0x1]
    %v162 = vperm.slane %v160, 0
    %v180 = vlaneseq
    %v181 = vand.u32 %v180, 127
    %v182 = vperm.slane %v140, %v181
    %v183 = vadd.s32 %v181, 4294967288
    %v184 = vperm.slane %v141, %v183
    %vm185 = vcmask 130112
    %v186 = vsel %vm185, %v184, %v182
    %v187 = vadd.s32 %v181, 4294967280
    %v188 = vperm.slane %v142, %v187
    %vm189 = vcmask 195712
    %v190 = vsel %vm189, %v188, %v186
    %v191 = vadd.s32 %v181, 4294967272
    %v192 = vperm.slane %v143, %v191
    %vm193 = vcmask 261312
    %v194 = vsel %vm193, %v192, %v190
    %v195 = vperm.slane %v144, %v181
    %v196 = vperm.slane %v145, %v183
    %v197 = vsel %vm185, %v196, %v195
    %v198 = vperm.slane %v146, %v187
    %v199 = vsel %vm189, %v198, %v197
    %v200 = vperm.slane %v147, %v191
    %v201 = vsel %vm193, %v200, %v199
    %v202 = vperm.slane %v148, %v181
    %v203 = vperm.slane %v149, %v183
    %v204 = vsel %vm185, %v203, %v202
    %v205 = vperm.slane %v150, %v187
    %v206 = vsel %vm189, %v205, %v204
    %v207 = vperm.slane %v151, %v191
    %v208 = vsel %vm193, %v207, %v206
    %v209 = vperm.slane %v152, %v181
    %v210 = vperm.slane %v153, %v183
    %v211 = vsel %vm185, %v210, %v209
    %v212 = vperm.slane %v154, %v187
    %v213 = vsel %vm189, %v212, %v211
    %v214 = vperm.slane %v155, %v191
    %v215 = vsel %vm193, %v214, %v213
    %vm216 = vcmask 1041409
    %v217 = vsel %vm216, %v201, %v194
    %vm218 = vcmask 1042434
    %v219 = vsel %vm218, %v208, %v217
    %vm220 = vcmask 1043459
    %v221 = vsel %vm220, %v215, %v219
    %vm222 = vcmask 261120
    %v223 = vsel %vm222, %v221, 0
    %225 = vmatpush.msra.mxu0 0.0
    %226 = vmatpush.msra.mxu0 0.0
    %227 = vmatpush.msra.mxu0 0.0
    %228 = vmatpush.msra.mxu0 0.0
    %229 = vmatpush.msra.mxu0 0.0
    %230 = vmatpush.msra.mxu0 0.0
    %231 = vmatpush.msra.mxu0 0.0
    %232 = vmatpush.msra.mxu0 0.0
    %233 = vmatpush.msra.mxu0 0.0
    %234 = vmatpush.msra.mxu0 0.0
    %235 = vmatpush.msra.mxu0 0.0
    %236 = vmatpush.msra.mxu0 0.0
    %237 = vmatpush.msra.mxu0 %v159
    %238 = vmatpush.msra.mxu0 %v158
    %239 = vmatpush.msra.mxu0 %v157
    %240 = vmatpush.msra.mxu0 %v156
    %241 = vmatmul.f32.gmra.mxu0 %v223
    %v242 = vpop.f32.mrf.mxu0
    %v243 = vadd.f32 %v162, %v242
    %244 = vdwg.mxu0
    %v245 = vmax.f32 %v243, 0.0
    %v246 = vld [vmem:[%s3] sm:$0x3]
    %v247 = vld [vmem:[%s4] sm:$0x1]
    %v249 = vperm.slane %v247, 0
    %vm251 = vcmask 15360
    %v253 = vsel %vm251, %v245, 0
    %vm255 = vcmask 1041408
    %v257 = vsel %vm255, %v246, 0
    %259 = vmatpush.msra.mxu0 0.0
    %260 = vmatpush.msra.mxu0 0.0
    %261 = vmatpush.msra.mxu0 0.0
    %262 = vmatpush.msra.mxu0 0.0
    %263 = vmatpush.msra.mxu0 0.0
    %264 = vmatpush.msra.mxu0 0.0
    %265 = vmatpush.msra.mxu0 0.0
    %266 = vmatpush.msra.mxu0 0.0
    %267 = vmatpush.msra.mxu0 0.0
    %268 = vmatpush.msra.mxu0 0.0
    %269 = vmatpush.msra.mxu0 0.0
    %270 = vmatpush.msra.mxu0 0.0
    %271 = vmatpush.msra.mxu0 0.0
    %272 = vmatpush.msra.mxu0 0.0
    %273 = vmatpush.msra.mxu0 0.0
    %274 = vmatpush.msra.mxu0 %v257
    %275 = vmatmul.f32.gmra.mxu0 %v253
    %v276 = vpop.f32.mrf.mxu0
    %v277 = vadd.f32 %v249, %v276
    %278 = vdwg.mxu0
    %v279 = vxor.u32 %v277, 2147483648
    %v280 = vmul.f32 %v279, 1.442695
    %v281 = vpow.pop %v280
    %v282 = vadd.f32 %v281, 1.0
    %v283 = vrcp.pop %v282
    %v284 = vmul.f32 %v282, %v283
    %v285 = vsub.f32 1.0, %v284
    %v286 = vmul.f32 %v283, %v285
    %v287 = vadd.f32 %v283, %v286
    %vm288 = vweird.f32 %v282
    %vm289 = vweird.f32 %v283
    %vm290 = vmor %vm288, %vm289
    %v291 = vsel %vm290, %v283, %v287
    %v292 = vand.u32 2147483647, %v282
    %vm293 = vcmp.eq.f32.partialorder %v292, 8.507059e+37
    %v294 = vand.u32 %v282, 2147483648
    %v295 = vor.u32 1.1754944e-38, %v294
    %v296 = vsel %vm293, %v295, %v291
    %v297 = vmul.f32 1.0, %v296
    %v298 = vperm.slane %v297, 0
    %v299 = vlaneseq
    %v300 = vshrl.u32 %v299, 7
    %302 = vset.pattern.permute.xlu0 %v300
    %303 = vperm.xlu0 %302, %v298
    %v304 = vpop.permute.xlu0 %303
    %v305 = vlaneseq
    %v306 = vshrl.u32 %v305, 7
    %v307 = vadd.s32 %v306, 8
    %308 = vset.pattern.permute.xlu0 %v307
    %309 = vperm.xlu0 %308, %v298
    %v310 = vpop.permute.xlu0 %309
    %v311 = vlaneseq
    %v312 = vshrl.u32 %v311, 7
    %v313 = vadd.s32 %v312, 16
    %314 = vset.pattern.permute.xlu0 %v313
    %315 = vperm.xlu0 %314, %v298
    %v316 = vpop.permute.xlu0 %315
    %v317 = vlaneseq
    %v318 = vshrl.u32 %v317, 7
    %v319 = vadd.s32 %v318, 24
    %320 = vset.pattern.permute.xlu0 %v319
    %321 = vperm.xlu0 %320, %v298
    %v322 = vpop.permute.xlu0 %321
    %v323 = vperm.slane %v297, 1
    %v324 = vlaneseq
    %v325 = vshrl.u32 %v324, 7
    %327 = vset.pattern.permute.xlu0 %v325
    %328 = vperm.xlu0 %327, %v323
    %v329 = vpop.permute.xlu0 %328
    %v330 = vlaneseq
    %v331 = vshrl.u32 %v330, 7
    %v332 = vadd.s32 %v331, 8
    %333 = vset.pattern.permute.xlu0 %v332
    %334 = vperm.xlu0 %333, %v323
    %v335 = vpop.permute.xlu0 %334
    %v336 = vlaneseq
    %v337 = vshrl.u32 %v336, 7
    %v338 = vadd.s32 %v337, 16
    %339 = vset.pattern.permute.xlu0 %v338
    %340 = vperm.xlu0 %339, %v323
    %v341 = vpop.permute.xlu0 %340
    %v342 = vlaneseq
    %v343 = vshrl.u32 %v342, 7
    %v344 = vadd.s32 %v343, 24
    %345 = vset.pattern.permute.xlu0 %v344
    %346 = vperm.xlu0 %345, %v323
    %v347 = vpop.permute.xlu0 %346
    %v348 = vperm.slane %v297, 2
    %v349 = vlaneseq
    %v350 = vshrl.u32 %v349, 7
    %352 = vset.pattern.permute.xlu0 %v350
    %353 = vperm.xlu0 %352, %v348
    %v354 = vpop.permute.xlu0 %353
    %v355 = vlaneseq
    %v356 = vshrl.u32 %v355, 7
    %v357 = vadd.s32 %v356, 8
    %358 = vset.pattern.permute.xlu0 %v357
    %359 = vperm.xlu0 %358, %v348
    %v360 = vpop.permute.xlu0 %359
    %v361 = vlaneseq
    %v362 = vshrl.u32 %v361, 7
    %v363 = vadd.s32 %v362, 16
    %364 = vset.pattern.permute.xlu0 %v363
    %365 = vperm.xlu0 %364, %v348
    %v366 = vpop.permute.xlu0 %365
    %v367 = vlaneseq
    %v368 = vshrl.u32 %v367, 7
    %v369 = vadd.s32 %v368, 24
    %370 = vset.pattern.permute.xlu0 %v369
    %371 = vperm.xlu0 %370, %v348
    %v372 = vpop.permute.xlu0 %371
    %v373 = vperm.slane %v297, 3
    %v374 = vlaneseq
    %v375 = vshrl.u32 %v374, 7
    %377 = vset.pattern.permute.xlu0 %v375
    %378 = vperm.xlu0 %377, %v373
    %v379 = vpop.permute.xlu0 %378
    %v380 = vlaneseq
    %v381 = vshrl.u32 %v380, 7
    %v382 = vadd.s32 %v381, 8
    %383 = vset.pattern.permute.xlu0 %v382
    %384 = vperm.xlu0 %383, %v373
    %v385 = vpop.permute.xlu0 %384
    %v386 = vlaneseq
    %v387 = vshrl.u32 %v386, 7
    %v388 = vadd.s32 %v387, 16
    %389 = vset.pattern.permute.xlu0 %v388
    %390 = vperm.xlu0 %389, %v373
    %v391 = vpop.permute.xlu0 %390
    %v392 = vlaneseq
    %v393 = vshrl.u32 %v392, 7
    %v394 = vadd.s32 %v393, 24
    %395 = vset.pattern.permute.xlu0 %v394
    %396 = vperm.xlu0 %395, %v373
    %v397 = vpop.permute.xlu0 %396
    %v398 = vmul.f32 %v60, %v304
    %v399 = vmul.f32 %v61, %v304
    %v400 = vmul.f32 %v62, %v310
    %v401 = vmul.f32 %v63, %v310
    %v402 = vmul.f32 %v64, %v316
    %v403 = vmul.f32 %v65, %v316
    %v404 = vmul.f32 %v66, %v322
    %v405 = vmul.f32 %v67, %v322
    %v406 = vmul.f32 %v68, %v329
    %v407 = vmul.f32 %v69, %v329
    %v408 = vmul.f32 %v70, %v335
    %v409 = vmul.f32 %v71, %v335
    %v410 = vmul.f32 %v72, %v341
    %v411 = vmul.f32 %v73, %v341
    %v412 = vmul.f32 %v74, %v347
    %v413 = vmul.f32 %v75, %v347
    %v414 = vmul.f32 %v76, %v354
    %v415 = vmul.f32 %v77, %v354
    %v416 = vmul.f32 %v78, %v360
    %v417 = vmul.f32 %v79, %v360
    %v418 = vmul.f32 %v80, %v366
    %v419 = vmul.f32 %v81, %v366
    %v420 = vmul.f32 %v82, %v372
    %v421 = vmul.f32 %v83, %v372
    %v422 = vmul.f32 %v84, %v379
    %v423 = vmul.f32 %v85, %v379
    %v424 = vmul.f32 %v86, %v385
    %v425 = vmul.f32 %v87, %v385
    %v426 = vmul.f32 %v88, %v391
    %v427 = vmul.f32 %v89, %v391
    %v428 = vmul.f32 %v90, %v397
    %v429 = vmul.f32 %v91, %v397
    %v430 = vmax.f32 %v398, %v400
    %v431 = vmax.f32 %v430, %v402
    %v432 = vmax.f32 %v431, %v404
    %v433 = vrot.slane %v432, 4
    %v434 = vmax.f32 %v432, %v433
    %v435 = vrot.slane %v434, 2
    %v436 = vmax.f32 %v434, %v435
    %v437 = vrot.slane %v436, 1
    %v438 = vmax.f32 %v436, %v437
    %v439 = vmax.f32 %v399, %v401
    %v440 = vmax.f32 %v439, %v403
    %v441 = vmax.f32 %v440, %v405
    %v442 = vrot.slane %v441, 4
    %v443 = vmax.f32 %v441, %v442
    %v444 = vrot.slane %v443, 2
    %v445 = vmax.f32 %v443, %v444
    %v446 = vrot.slane %v445, 1
    %v447 = vmax.f32 %v445, %v446
    %v448 = vmax.f32 %v406, %v408
    %v449 = vmax.f32 %v448, %v410
    %v450 = vmax.f32 %v449, %v412
    %v451 = vrot.slane %v450, 4
    %v452 = vmax.f32 %v450, %v451
    %v453 = vrot.slane %v452, 2
    %v454 = vmax.f32 %v452, %v453
    %v455 = vrot.slane %v454, 1
    %v456 = vmax.f32 %v454, %v455
    %v457 = vmax.f32 %v407, %v409
    %v458 = vmax.f32 %v457, %v411
    %v459 = vmax.f32 %v458, %v413
    %v460 = vrot.slane %v459, 4
    %v461 = vmax.f32 %v459, %v460
    %v462 = vrot.slane %v461, 2
    %v463 = vmax.f32 %v461, %v462
    %v464 = vrot.slane %v463, 1
    %v465 = vmax.f32 %v463, %v464
    %v466 = vmax.f32 %v414, %v416
    %v467 = vmax.f32 %v466, %v418
    %v468 = vmax.f32 %v467, %v420
    %v469 = vrot.slane %v468, 4
    %v470 = vmax.f32 %v468, %v469
    %v471 = vrot.slane %v470, 2
    %v472 = vmax.f32 %v470, %v471
    %v473 = vrot.slane %v472, 1
    %v474 = vmax.f32 %v472, %v473
    %v475 = vmax.f32 %v415, %v417
    %v476 = vmax.f32 %v475, %v419
    %v477 = vmax.f32 %v476, %v421
    %v478 = vrot.slane %v477, 4
    %v479 = vmax.f32 %v477, %v478
    %v480 = vrot.slane %v479, 2
    %v481 = vmax.f32 %v479, %v480
    %v482 = vrot.slane %v481, 1
    %v483 = vmax.f32 %v481, %v482
    %v484 = vmax.f32 %v422, %v424
    %v485 = vmax.f32 %v484, %v426
    %v486 = vmax.f32 %v485, %v428
    %v487 = vrot.slane %v486, 4
    %v488 = vmax.f32 %v486, %v487
    %v489 = vrot.slane %v488, 2
    %v490 = vmax.f32 %v488, %v489
    %v491 = vrot.slane %v490, 1
    %v492 = vmax.f32 %v490, %v491
    %v493 = vmax.f32 %v423, %v425
    %v494 = vmax.f32 %v493, %v427
    %v495 = vmax.f32 %v494, %v429
    %v496 = vrot.slane %v495, 4
    %v497 = vmax.f32 %v495, %v496
    %v498 = vrot.slane %v497, 2
    %v499 = vmax.f32 %v497, %v498
    %v500 = vrot.slane %v499, 1
    %v501 = vmax.f32 %v499, %v500
    %v502 = vadd.f32 %v398, %v400
    %v503 = vadd.f32 %v502, %v402
    %v504 = vadd.f32 %v503, %v404
    %v505 = vrot.slane %v504, 4
    %v506 = vadd.f32 %v504, %v505
    %v507 = vrot.slane %v506, 2
    %v508 = vadd.f32 %v506, %v507
    %v509 = vrot.slane %v508, 1
    %v510 = vadd.f32 %v508, %v509
    %v511 = vadd.f32 %v399, %v401
    %v512 = vadd.f32 %v511, %v403
    %v513 = vadd.f32 %v512, %v405
    %v514 = vrot.slane %v513, 4
    %v515 = vadd.f32 %v513, %v514
    %v516 = vrot.slane %v515, 2
    %v517 = vadd.f32 %v515, %v516
    %v518 = vrot.slane %v517, 1
    %v519 = vadd.f32 %v517, %v518
    %v520 = vadd.f32 %v406, %v408
    %v521 = vadd.f32 %v520, %v410
    %v522 = vadd.f32 %v521, %v412
    %v523 = vrot.slane %v522, 4
    %v524 = vadd.f32 %v522, %v523
    %v525 = vrot.slane %v524, 2
    %v526 = vadd.f32 %v524, %v525
    %v527 = vrot.slane %v526, 1
    %v528 = vadd.f32 %v526, %v527
    %v529 = vadd.f32 %v407, %v409
    %v530 = vadd.f32 %v529, %v411
    %v531 = vadd.f32 %v530, %v413
    %v532 = vrot.slane %v531, 4
    %v533 = vadd.f32 %v531, %v532
    %v534 = vrot.slane %v533, 2
    %v535 = vadd.f32 %v533, %v534
    %v536 = vrot.slane %v535, 1
    %v537 = vadd.f32 %v535, %v536
    %v538 = vadd.f32 %v414, %v416
    %v539 = vadd.f32 %v538, %v418
    %v540 = vadd.f32 %v539, %v420
    %v541 = vrot.slane %v540, 4
    %v542 = vadd.f32 %v540, %v541
    %v543 = vrot.slane %v542, 2
    %v544 = vadd.f32 %v542, %v543
    %v545 = vrot.slane %v544, 1
    %v546 = vadd.f32 %v544, %v545
    %v547 = vadd.f32 %v415, %v417
    %v548 = vadd.f32 %v547, %v419
    %v549 = vadd.f32 %v548, %v421
    %v550 = vrot.slane %v549, 4
    %v551 = vadd.f32 %v549, %v550
    %v552 = vrot.slane %v551, 2
    %v553 = vadd.f32 %v551, %v552
    %v554 = vrot.slane %v553, 1
    %v555 = vadd.f32 %v553, %v554
    %v556 = vadd.f32 %v422, %v424
    %v557 = vadd.f32 %v556, %v426
    %v558 = vadd.f32 %v557, %v428
    %v559 = vrot.slane %v558, 4
    %v560 = vadd.f32 %v558, %v559
    %v561 = vrot.slane %v560, 2
    %v562 = vadd.f32 %v560, %v561
    %v563 = vrot.slane %v562, 1
    %v564 = vadd.f32 %v562, %v563
    %v565 = vadd.f32 %v423, %v425
    %v566 = vadd.f32 %v565, %v427
    %v567 = vadd.f32 %v566, %v429
    %v568 = vrot.slane %v567, 4
    %v569 = vadd.f32 %v567, %v568
    %v570 = vrot.slane %v569, 2
    %v571 = vadd.f32 %v569, %v570
    %v572 = vrot.slane %v571, 1
    %v573 = vadd.f32 %v571, %v572
    %v574 = vmul.f32 %v510, 0.03125
    %v575 = vmul.f32 %v519, 0.03125
    %v576 = vmul.f32 %v528, 0.03125
    %v577 = vmul.f32 %v537, 0.03125
    %v578 = vmul.f32 %v546, 0.03125
    %v579 = vmul.f32 %v555, 0.03125
    %v580 = vmul.f32 %v564, 0.03125
    %v581 = vmul.f32 %v573, 0.03125
    %v590 = vsel %vm216, %v456, %v438
    %v591 = vsel %vm218, %v474, %v590
    %v592 = vsel %vm220, %v492, %v591
    %v593 = vsel %vm216, %v465, %v447
    %v594 = vsel %vm218, %v483, %v593
    %v595 = vsel %vm220, %v501, %v594
    %v606 = vsel %vm216, %v576, %v574
    %v607 = vsel %vm218, %v578, %v606
    %v608 = vsel %vm220, %v580, %v607
    %v609 = vsel %vm216, %v577, %v575
    %v610 = vsel %vm218, %v579, %v609
    %v611 = vsel %vm220, %v581, %v610
    %v614 = vld [vmem:[#allocation6] sm:$0xff]
    %v615 = vld [vmem:[#allocation6 + $0x8] sm:$0xff]
    %v616 = vld [vmem:[#allocation6 + $0x10] sm:$0xff]
    %v617 = vld [vmem:[#allocation6 + $0x18] sm:$0xff]
    %v618 = vld [vmem:[#allocation6 + $0x20] sm:$0xff]
    %v619 = vld [vmem:[#allocation6 + $0x28] sm:$0xff]
    %v620 = vld [vmem:[#allocation6 + $0x30] sm:$0xff]
    %v621 = vld [vmem:[#allocation6 + $0x38] sm:$0xff]
    %v622 = vld [vmem:[#allocation6 + $0x40] sm:$0xff]
    %v623 = vld [vmem:[#allocation6 + $0x48] sm:$0xff]
    %v624 = vld [vmem:[#allocation6 + $0x50] sm:$0xff]
    %v625 = vld [vmem:[#allocation6 + $0x58] sm:$0xff]
    %v626 = vld [vmem:[#allocation6 + $0x60] sm:$0xff]
    %v627 = vld [vmem:[#allocation6 + $0x68] sm:$0xff]
    %v628 = vld [vmem:[#allocation6 + $0x70] sm:$0xff]
    %v629 = vld [vmem:[#allocation6 + $0x78] sm:$0xff]
    %v630 = vld [vmem:[#allocation6 + $0x80] sm:$0xff]
    %v631 = vld [vmem:[#allocation6 + $0x88] sm:$0xff]
    %v632 = vld [vmem:[#allocation6 + $0x90] sm:$0xff]
    %v633 = vld [vmem:[#allocation6 + $0x98] sm:$0xff]
    %v634 = vld [vmem:[#allocation6 + $0xa0] sm:$0xff]
    %v635 = vld [vmem:[#allocation6 + $0xa8] sm:$0xff]
    %v636 = vld [vmem:[#allocation6 + $0xb0] sm:$0xff]
    %v637 = vld [vmem:[#allocation6 + $0xb8] sm:$0xff]
    %v638 = vld [vmem:[#allocation6 + $0xc0] sm:$0xff]
    %v639 = vld [vmem:[#allocation6 + $0xc8] sm:$0xff]
    %v640 = vld [vmem:[#allocation6 + $0xd0] sm:$0xff]
    %v641 = vld [vmem:[#allocation6 + $0xd8] sm:$0xff]
    %v642 = vld [vmem:[#allocation6 + $0xe0] sm:$0xff]
    %v643 = vld [vmem:[#allocation6 + $0xe8] sm:$0xff]
    %v644 = vld [vmem:[#allocation6 + $0xf0] sm:$0xff]
    %v645 = vld [vmem:[#allocation6 + $0xf8] sm:$0xff]
    %v646 = vld [vmem:[#allocation6 + $0x100] sm:$0xff]
    %v647 = vld [vmem:[#allocation6 + $0x108] sm:$0xff]
    %v648 = vld [vmem:[#allocation6 + $0x110] sm:$0xff]
    %v649 = vld [vmem:[#allocation6 + $0x118] sm:$0xff]
    %v650 = vld [vmem:[#allocation6 + $0x120] sm:$0xff]
    %v651 = vld [vmem:[#allocation6 + $0x128] sm:$0xff]
    %v652 = vld [vmem:[#allocation6 + $0x130] sm:$0xff]
    %v653 = vld [vmem:[#allocation6 + $0x138] sm:$0xff]
    %v654 = vld [vmem:[#allocation6 + $0x140] sm:$0xff]
    %v655 = vld [vmem:[#allocation6 + $0x148] sm:$0xff]
    %v656 = vld [vmem:[#allocation6 + $0x150] sm:$0xff]
    %v657 = vld [vmem:[#allocation6 + $0x158] sm:$0xff]
    %v658 = vld [vmem:[#allocation6 + $0x160] sm:$0xff]
    %v659 = vld [vmem:[#allocation6 + $0x168] sm:$0xff]
    %v660 = vld [vmem:[#allocation6 + $0x170] sm:$0xff]
    %v661 = vld [vmem:[#allocation6 + $0x178] sm:$0xff]
    %v662 = vld [vmem:[#allocation6 + $0x180] sm:$0xff]
    %v663 = vld [vmem:[#allocation6 + $0x188] sm:$0xff]
    %v664 = vld [vmem:[#allocation6 + $0x190] sm:$0xff]
    %v665 = vld [vmem:[#allocation6 + $0x198] sm:$0xff]
    %v666 = vld [vmem:[#allocation6 + $0x1a0] sm:$0xff]
    %v667 = vld [vmem:[#allocation6 + $0x1a8] sm:$0xff]
    %v668 = vld [vmem:[#allocation6 + $0x1b0] sm:$0xff]
    %v669 = vld [vmem:[#allocation6 + $0x1b8] sm:$0xff]
    %v670 = vld [vmem:[#allocation6 + $0x1c0] sm:$0xff]
    %v671 = vld [vmem:[#allocation6 + $0x1c8] sm:$0xff]
    %v672 = vld [vmem:[#allocation6 + $0x1d0] sm:$0xff]
    %v673 = vld [vmem:[#allocation6 + $0x1d8] sm:$0xff]
    %v674 = vld [vmem:[#allocation6 + $0x1e0] sm:$0xff]
    %v675 = vld [vmem:[#allocation6 + $0x1e8] sm:$0xff]
    %v676 = vld [vmem:[#allocation6 + $0x1f0] sm:$0xff]
    %v677 = vld [vmem:[#allocation6 + $0x1f8] sm:$0xff]
    %v678 = vld [vmem:[#allocation6 + $0x200] sm:$0xff]
    %v679 = vld [vmem:[#allocation6 + $0x208] sm:$0xff]
    %v680 = vld [vmem:[#allocation6 + $0x210] sm:$0xff]
    %v681 = vld [vmem:[#allocation6 + $0x218] sm:$0xff]
    %v682 = vld [vmem:[#allocation6 + $0x220] sm:$0xff]
    %v683 = vld [vmem:[#allocation6 + $0x228] sm:$0xff]
    %v684 = vld [vmem:[#allocation6 + $0x230] sm:$0xff]
    %v685 = vld [vmem:[#allocation6 + $0x238] sm:$0xff]
    %v686 = vld [vmem:[#allocation6 + $0x240] sm:$0xff]
    %v687 = vld [vmem:[#allocation6 + $0x248] sm:$0xff]
    %v688 = vld [vmem:[#allocation6 + $0x250] sm:$0xff]
    %v689 = vld [vmem:[#allocation6 + $0x258] sm:$0xff]
    %v690 = vld [vmem:[#allocation6 + $0x260] sm:$0xff]
    %v691 = vld [vmem:[#allocation6 + $0x268] sm:$0xff]
    %v692 = vld [vmem:[#allocation6 + $0x270] sm:$0xff]
    %v693 = vld [vmem:[#allocation6 + $0x278] sm:$0xff]
    %v694 = vld [vmem:[#allocation6 + $0x280] sm:$0xff]
    %v695 = vld [vmem:[#allocation6 + $0x288] sm:$0xff]
    %v696 = vld [vmem:[#allocation6 + $0x290] sm:$0xff]
    %v697 = vld [vmem:[#allocation6 + $0x298] sm:$0xff]
    %v698 = vld [vmem:[#allocation6 + $0x2a0] sm:$0xff]
    %v699 = vld [vmem:[#allocation6 + $0x2a8] sm:$0xff]
    %v700 = vld [vmem:[#allocation6 + $0x2b0] sm:$0xff]
    %v701 = vld [vmem:[#allocation6 + $0x2b8] sm:$0xff]
    %v702 = vld [vmem:[#allocation6 + $0x2c0] sm:$0xff]
    %v703 = vld [vmem:[#allocation6 + $0x2c8] sm:$0xff]
    %v704 = vld [vmem:[#allocation6 + $0x2d0] sm:$0xff]
    %v705 = vld [vmem:[#allocation6 + $0x2d8] sm:$0xff]
    %v706 = vld [vmem:[#allocation6 + $0x2e0] sm:$0xff]
    %v707 = vld [vmem:[#allocation6 + $0x2e8] sm:$0xff]
    %v708 = vld [vmem:[#allocation6 + $0x2f0] sm:$0xff]
    %v709 = vld [vmem:[#allocation6 + $0x2f8] sm:$0xff]
    %v710 = vld [vmem:[#allocation6 + $0x300] sm:$0xff]
    %v711 = vld [vmem:[#allocation6 + $0x308] sm:$0xff]
    %v712 = vld [vmem:[#allocation6 + $0x310] sm:$0xff]
    %v713 = vld [vmem:[#allocation6 + $0x318] sm:$0xff]
    %v714 = vld [vmem:[#allocation6 + $0x320] sm:$0xff]
    %v715 = vld [vmem:[#allocation6 + $0x328] sm:$0xff]
    %v716 = vld [vmem:[#allocation6 + $0x330] sm:$0xff]
    %v717 = vld [vmem:[#allocation6 + $0x338] sm:$0xff]
    %v718 = vld [vmem:[#allocation6 + $0x340] sm:$0xff]
    %v719 = vld [vmem:[#allocation6 + $0x348] sm:$0xff]
    %v720 = vld [vmem:[#allocation6 + $0x350] sm:$0xff]
    %v721 = vld [vmem:[#allocation6 + $0x358] sm:$0xff]
    %v722 = vld [vmem:[#allocation6 + $0x360] sm:$0xff]
    %v723 = vld [vmem:[#allocation6 + $0x368] sm:$0xff]
    %v724 = vld [vmem:[#allocation6 + $0x370] sm:$0xff]
    %v725 = vld [vmem:[#allocation6 + $0x378] sm:$0xff]
    %v726 = vld [vmem:[#allocation6 + $0x380] sm:$0xff]
    %v727 = vld [vmem:[#allocation6 + $0x388] sm:$0xff]
    %v728 = vld [vmem:[#allocation6 + $0x390] sm:$0xff]
    %v729 = vld [vmem:[#allocation6 + $0x398] sm:$0xff]
    %v730 = vld [vmem:[#allocation6 + $0x3a0] sm:$0xff]
    %v731 = vld [vmem:[#allocation6 + $0x3a8] sm:$0xff]
    %v732 = vld [vmem:[#allocation6 + $0x3b0] sm:$0xff]
    %v733 = vld [vmem:[#allocation6 + $0x3b8] sm:$0xff]
    %v734 = vld [vmem:[#allocation6 + $0x3c0] sm:$0xff]
    %v735 = vld [vmem:[#allocation6 + $0x3c8] sm:$0xff]
    %v736 = vld [vmem:[#allocation6 + $0x3d0] sm:$0xff]
    %v737 = vld [vmem:[#allocation6 + $0x3d8] sm:$0xff]
    %v738 = vld [vmem:[#allocation6 + $0x3e0] sm:$0xff]
    %v739 = vld [vmem:[#allocation6 + $0x3e8] sm:$0xff]
    %v740 = vld [vmem:[#allocation6 + $0x3f0] sm:$0xff]
    %v741 = vld [vmem:[#allocation6 + $0x3f8] sm:$0xff]
    %s742 = sld [smem:[#allocation2]]
    %v743 = vstv %s742
    %744 = vmatpush.msra.mxu0 %v644
    %745 = vmatpush.msra.mxu0 %v642
    %746 = vmatpush.msra.mxu0 %v640
    %747 = vmatpush.msra.mxu0 %v638
    %748 = vmatpush.msra.mxu0 %v636
    %749 = vmatpush.msra.mxu0 %v634
    %750 = vmatpush.msra.mxu0 %v632
    %751 = vmatpush.msra.mxu0 %v630
    %752 = vmatpush.msra.mxu0 %v628
    %753 = vmatpush.msra.mxu0 %v626
    %754 = vmatpush.msra.mxu0 %v624
    %755 = vmatpush.msra.mxu0 %v622
    %756 = vmatpush.msra.mxu0 %v620
    %757 = vmatpush.msra.mxu0 %v618
    %758 = vmatpush.msra.mxu0 %v616
    %759 = vmatpush.msra.mxu0 %v614
    %760 = vmatmul.f32.gmra.mxu0 %v592
    %v761 = vpop.f32.mrf.mxu0
    %v762 = vadd.f32 %v743, %v761
    %763 = vdwg.mxu0
    %764 = vmatpush.msra.mxu0 %v676
    %765 = vmatpush.msra.mxu0 %v674
    %766 = vmatpush.msra.mxu0 %v672
    %767 = vmatpush.msra.mxu0 %v670
    %768 = vmatpush.msra.mxu0 %v668
    %769 = vmatpush.msra.mxu0 %v666
    %770 = vmatpush.msra.mxu0 %v664
    %771 = vmatpush.msra.mxu0 %v662
    %772 = vmatpush.msra.mxu0 %v660
    %773 = vmatpush.msra.mxu0 %v658
    %774 = vmatpush.msra.mxu0 %v656
    %775 = vmatpush.msra.mxu0 %v654
    %776 = vmatpush.msra.mxu0 %v652
    %777 = vmatpush.msra.mxu0 %v650
    %778 = vmatpush.msra.mxu0 %v648
    %779 = vmatpush.msra.mxu0 %v646
    %780 = vmatmul.f32.gmra.mxu0 %v595
    %v781 = vpop.f32.mrf.mxu0
    %v782 = vadd.f32 %v762, %v781
    %783 = vdwg.mxu0
    %784 = vmatpush.msra.mxu0 %v708
    %785 = vmatpush.msra.mxu0 %v706
    %786 = vmatpush.msra.mxu0 %v704
    %787 = vmatpush.msra.mxu0 %v702
    %788 = vmatpush.msra.mxu0 %v700
    %789 = vmatpush.msra.mxu0 %v698
    %790 = vmatpush.msra.mxu0 %v696
    %791 = vmatpush.msra.mxu0 %v694
    %792 = vmatpush.msra.mxu0 %v692
    %793 = vmatpush.msra.mxu0 %v690
    %794 = vmatpush.msra.mxu0 %v688
    %795 = vmatpush.msra.mxu0 %v686
    %796 = vmatpush.msra.mxu0 %v684
    %797 = vmatpush.msra.mxu0 %v682
    %798 = vmatpush.msra.mxu0 %v680
    %799 = vmatpush.msra.mxu0 %v678
    %800 = vmatmul.f32.gmra.mxu0 %v608
    %v801 = vpop.f32.mrf.mxu0
    %v802 = vadd.f32 %v782, %v801
    %803 = vdwg.mxu0
    %804 = vmatpush.msra.mxu0 %v740
    %805 = vmatpush.msra.mxu0 %v738
    %806 = vmatpush.msra.mxu0 %v736
    %807 = vmatpush.msra.mxu0 %v734
    %808 = vmatpush.msra.mxu0 %v732
    %809 = vmatpush.msra.mxu0 %v730
    %810 = vmatpush.msra.mxu0 %v728
    %811 = vmatpush.msra.mxu0 %v726
    %812 = vmatpush.msra.mxu0 %v724
    %813 = vmatpush.msra.mxu0 %v722
    %814 = vmatpush.msra.mxu0 %v720
    %815 = vmatpush.msra.mxu0 %v718
    %816 = vmatpush.msra.mxu0 %v716
    %817 = vmatpush.msra.mxu0 %v714
    %818 = vmatpush.msra.mxu0 %v712
    %819 = vmatpush.msra.mxu0 %v710
    %820 = vmatmul.f32.gmra.mxu0 %v611
    %v821 = vpop.f32.mrf.mxu0
    %v822 = vadd.f32 %v802, %v821
    %823 = vdwg.mxu0
    %824 = vmatpush.msra.mxu0 %v645
    %825 = vmatpush.msra.mxu0 %v643
    %826 = vmatpush.msra.mxu0 %v641
    %827 = vmatpush.msra.mxu0 %v639
    %828 = vmatpush.msra.mxu0 %v637
    %829 = vmatpush.msra.mxu0 %v635
    %830 = vmatpush.msra.mxu0 %v633
    %831 = vmatpush.msra.mxu0 %v631
    %832 = vmatpush.msra.mxu0 %v629
    %833 = vmatpush.msra.mxu0 %v627
    %834 = vmatpush.msra.mxu0 %v625
    %835 = vmatpush.msra.mxu0 %v623
    %836 = vmatpush.msra.mxu0 %v621
    %837 = vmatpush.msra.mxu0 %v619
    %838 = vmatpush.msra.mxu0 %v617
    %839 = vmatpush.msra.mxu0 %v615
    %840 = vmatmul.f32.gmra.mxu0 %v592
    %v841 = vpop.f32.mrf.mxu0
    %v842 = vadd.f32 %v743, %v841
    %843 = vdwg.mxu0
    %844 = vmatpush.msra.mxu0 %v677
    %845 = vmatpush.msra.mxu0 %v675
    %846 = vmatpush.msra.mxu0 %v673
    %847 = vmatpush.msra.mxu0 %v671
    %848 = vmatpush.msra.mxu0 %v669
    %849 = vmatpush.msra.mxu0 %v667
    %850 = vmatpush.msra.mxu0 %v665
    %851 = vmatpush.msra.mxu0 %v663
    %852 = vmatpush.msra.mxu0 %v661
    %853 = vmatpush.msra.mxu0 %v659
    %854 = vmatpush.msra.mxu0 %v657
    %855 = vmatpush.msra.mxu0 %v655
    %856 = vmatpush.msra.mxu0 %v653
    %857 = vmatpush.msra.mxu0 %v651
    %858 = vmatpush.msra.mxu0 %v649
    %859 = vmatpush.msra.mxu0 %v647
    %860 = vmatmul.f32.gmra.mxu0 %v595
    %v861 = vpop.f32.mrf.mxu0
    %v862 = vadd.f32 %v842, %v861
    %863 = vdwg.mxu0
    %864 = vmatpush.msra.mxu0 %v709
    %865 = vmatpush.msra.mxu0 %v707
    %866 = vmatpush.msra.mxu0 %v705
    %867 = vmatpush.msra.mxu0 %v703
    %868 = vmatpush.msra.mxu0 %v701
    %869 = vmatpush.msra.mxu0 %v699
    %870 = vmatpush.msra.mxu0 %v697
    %871 = vmatpush.msra.mxu0 %v695
    %872 = vmatpush.msra.mxu0 %v693
    %873 = vmatpush.msra.mxu0 %v691
    %874 = vmatpush.msra.mxu0 %v689
    %875 = vmatpush.msra.mxu0 %v687
    %876 = vmatpush.msra.mxu0 %v685
    %877 = vmatpush.msra.mxu0 %v683
    %878 = vmatpush.msra.mxu0 %v681
    %879 = vmatpush.msra.mxu0 %v679
    %880 = vmatmul.f32.gmra.mxu0 %v608
    %v881 = vpop.f32.mrf.mxu0
    %v882 = vadd.f32 %v862, %v881
    %883 = vdwg.mxu0
    %884 = vmatpush.msra.mxu0 %v741
    %885 = vmatpush.msra.mxu0 %v739
    %886 = vmatpush.msra.mxu0 %v737
    %887 = vmatpush.msra.mxu0 %v735
    %888 = vmatpush.msra.mxu0 %v733
    %889 = vmatpush.msra.mxu0 %v731
    %890 = vmatpush.msra.mxu0 %v729
    %891 = vmatpush.msra.mxu0 %v727
    %892 = vmatpush.msra.mxu0 %v725
    %893 = vmatpush.msra.mxu0 %v723
    %894 = vmatpush.msra.mxu0 %v721
    %895 = vmatpush.msra.mxu0 %v719
    %896 = vmatpush.msra.mxu0 %v717
    %897 = vmatpush.msra.mxu0 %v715
    %898 = vmatpush.msra.mxu0 %v713
    %899 = vmatpush.msra.mxu0 %v711
    %900 = vmatmul.f32.gmra.mxu0 %v611
    %v901 = vpop.f32.mrf.mxu0
    %v902 = vadd.f32 %v882, %v901
    %903 = vdwg.mxu0
    %v904 = vxor.u32 %v822, 2147483648
    %v905 = vxor.u32 %v902, 2147483648
    %v906 = vmul.f32 %v904, 1.442695
    %v907 = vpow.pop %v906
    %v908 = vmul.f32 %v905, 1.442695
    %v909 = vpow.pop %v908
    %v910 = vadd.f32 %v907, 1.0
    %v911 = vadd.f32 %v909, 1.0
    %v912 = vrcp.pop %v910
    %v913 = vmul.f32 %v910, %v912
    %v914 = vsub.f32 1.0, %v913
    %v915 = vmul.f32 %v912, %v914
    %v916 = vadd.f32 %v912, %v915
    %vm917 = vweird.f32 %v910
    %vm918 = vweird.f32 %v912
    %vm919 = vmor %vm917, %vm918
    %v920 = vsel %vm919, %v912, %v916
    %v921 = vand.u32 2147483647, %v910
    %vm922 = vcmp.eq.f32.partialorder %v921, 8.507059e+37
    %v923 = vand.u32 %v910, 2147483648
    %v924 = vor.u32 1.1754944e-38, %v923
    %v925 = vsel %vm922, %v924, %v920
    %v926 = vmul.f32 1.0, %v925
    %v927 = vrcp.pop %v911
    %v928 = vmul.f32 %v911, %v927
    %v929 = vsub.f32 1.0, %v928
    %v930 = vmul.f32 %v927, %v929
    %v931 = vadd.f32 %v927, %v930
    %vm932 = vweird.f32 %v911
    %vm933 = vweird.f32 %v927
    %vm934 = vmor %vm932, %vm933
    %v935 = vsel %vm934, %v927, %v931
    %v936 = vand.u32 2147483647, %v911
    %vm937 = vcmp.eq.f32.partialorder %v936, 8.507059e+37
    %v938 = vand.u32 %v911, 2147483648
    %v939 = vor.u32 1.1754944e-38, %v938
    %v940 = vsel %vm937, %v939, %v935
    %v941 = vmul.f32 1.0, %v940
    %v944 = vrot.slane %v941, 7
    %vm945 = vcmask 1040384
    %v946 = vsel %vm945, %v926, %v944
    %v947 = vsel %vm216, %v926, %v944
    %v948 = vrot.slane %v947, 1
    %v949 = vsel %vm218, %v926, %v944
    %v950 = vrot.slane %v949, 2
    %v951 = vsel %vm220, %v926, %v944
    %v952 = vrot.slane %v951, 3
    %v953 = vperm.slane %v946, 0
    %v954 = vperm.slane %v946, 1
    %v955 = vperm.slane %v948, 0
    %v956 = vperm.slane %v948, 1
    %v957 = vperm.slane %v950, 0
    %v958 = vperm.slane %v950, 1
    %v959 = vperm.slane %v952, 0
    %v960 = vperm.slane %v952, 1
    %v969 = vmul.f32 %v398, %v953
    %v970 = vmul.f32 %v399, %v954
    %v971 = vmul.f32 %v400, %v953
    %v972 = vmul.f32 %v401, %v954
    %v973 = vmul.f32 %v402, %v953
    %v974 = vmul.f32 %v403, %v954
    %v975 = vmul.f32 %v404, %v953
    %v976 = vmul.f32 %v405, %v954
    %v977 = vmul.f32 %v406, %v955
    %v978 = vmul.f32 %v407, %v956
    %v979 = vmul.f32 %v408, %v955
    %v980 = vmul.f32 %v409, %v956
    %v981 = vmul.f32 %v410, %v955
    %v982 = vmul.f32 %v411, %v956
    %v983 = vmul.f32 %v412, %v955
    %v984 = vmul.f32 %v413, %v956
    %v985 = vmul.f32 %v414, %v957
    %v986 = vmul.f32 %v415, %v958
    %v987 = vmul.f32 %v416, %v957
    %v988 = vmul.f32 %v417, %v958
    %v989 = vmul.f32 %v418, %v957
    %v990 = vmul.f32 %v419, %v958
    %v991 = vmul.f32 %v420, %v957
    %v992 = vmul.f32 %v421, %v958
    %v993 = vmul.f32 %v422, %v959
    %v994 = vmul.f32 %v423, %v960
    %v995 = vmul.f32 %v424, %v959
    %v996 = vmul.f32 %v425, %v960
    %v997 = vmul.f32 %v426, %v959
    %v998 = vmul.f32 %v427, %v960
    %v999 = vmul.f32 %v428, %v959
    %v1000 = vmul.f32 %v429, %v960
    %1001 = vst [vmem:[#allocation8] sm:$0xff] %v969
    %1002 = vst [vmem:[#allocation8 + $0x8] sm:$0xff] %v970
    %1003 = vst [vmem:[#allocation8 + $0x10] sm:$0xff] %v971
    %1004 = vst [vmem:[#allocation8 + $0x18] sm:$0xff] %v972
    %1005 = vst [vmem:[#allocation8 + $0x20] sm:$0xff] %v973
    %1006 = vst [vmem:[#allocation8 + $0x28] sm:$0xff] %v974
    %1007 = vst [vmem:[#allocation8 + $0x30] sm:$0xff] %v975
    %1008 = vst [vmem:[#allocation8 + $0x38] sm:$0xff] %v976
    %1009 = vst [vmem:[#allocation8 + $0x40] sm:$0xff] %v977
    %1010 = vst [vmem:[#allocation8 + $0x48] sm:$0xff] %v978
    %1011 = vst [vmem:[#allocation8 + $0x50] sm:$0xff] %v979
    %1012 = vst [vmem:[#allocation8 + $0x58] sm:$0xff] %v980
    %1013 = vst [vmem:[#allocation8 + $0x60] sm:$0xff] %v981
    %1014 = vst [vmem:[#allocation8 + $0x68] sm:$0xff] %v982
    %1015 = vst [vmem:[#allocation8 + $0x70] sm:$0xff] %v983
    %1016 = vst [vmem:[#allocation8 + $0x78] sm:$0xff] %v984
    %1017 = vst [vmem:[#allocation8 + $0x80] sm:$0xff] %v985
    %1018 = vst [vmem:[#allocation8 + $0x88] sm:$0xff] %v986
    %1019 = vst [vmem:[#allocation8 + $0x90] sm:$0xff] %v987
    %1020 = vst [vmem:[#allocation8 + $0x98] sm:$0xff] %v988
    %1021 = vst [vmem:[#allocation8 + $0xa0] sm:$0xff] %v989
    %1022 = vst [vmem:[#allocation8 + $0xa8] sm:$0xff] %v990
    %1023 = vst [vmem:[#allocation8 + $0xb0] sm:$0xff] %v991
    %1024 = vst [vmem:[#allocation8 + $0xb8] sm:$0xff] %v992
    %1025 = vst [vmem:[#allocation8 + $0xc0] sm:$0xff] %v993
    %1026 = vst [vmem:[#allocation8 + $0xc8] sm:$0xff] %v994
    %1027 = vst [vmem:[#allocation8 + $0xd0] sm:$0xff] %v995
    %1028 = vst [vmem:[#allocation8 + $0xd8] sm:$0xff] %v996
    %1029 = vst [vmem:[#allocation8 + $0xe0] sm:$0xff] %v997
    %1030 = vst [vmem:[#allocation8 + $0xe8] sm:$0xff] %v998
    %1031 = vst [vmem:[#allocation8 + $0xf0] sm:$0xff] %v999
    %1032 = vst [vmem:[#allocation8 + $0xf8] sm:$0xff] %v1000
    // Predicated region
    $region38: #{tpu_custom_call.1} parent=1 // pred_check
      _
    $region39: #{tpu_custom_call.1} parent=1 // pred_check_branch
      %1034 = sbr.rel (0) target = $region41
    $region40: #{tpu_custom_call.1} parent=1 // pred_region
      %1036 = vsyncadd [#allocation5], 0
      %s1037 = sshll.u32 [#allocation8], 4
      %s1038 = int_to_ptr.vmem [resolvable:$true] %s1037
      %s1039 = sshll.u32 %s7, 4
      %s1040 = int_to_ptr.hbm [resolvable:$true] %s1039
      %1045 = dma.vmem_to_hbm [thread:$0]  %s1038, 4096, %s1040, [#allocation5], 256, 256, 16
    $region41: #{tpu_custom_call.1} parent=1 // pred_fallthru
      _
    // Predicated region
    $region42: #{tpu_custom_call.1} parent=1 // pred_check
      _
    $region43: #{tpu_custom_call.1} parent=1 // pred_check_branch
      %1047 = sbr.rel (0) target = $region45
    $region44: #{tpu_custom_call.1} parent=1 // pred_region
      %1049 = dma.done [#allocation5], 4096
    $region45: #{tpu_custom_call.1} parent=1 // pred_fallthru
      _
    %1050 = vsyncpa [#allocation4], 1
    %1051 = vsyncpa [#allocation7], 1
    %1052 = vsyncpa [#allocation5], 1

</llo_original>
